<compile_context>
chip_gen: v6e
topology: v6e:2x2x1
jax: 0.10.0
libtpu: 0.0.40
codegen_flags: <defaults>
</compile_context>

<pallas_src>
import functools

import jax
import jax.numpy as jnp
import numpy as np
from jax.experimental import pallas as pl
from jax.experimental.pallas import tpu as pltpu


def _round_up(x, n):
    return ((x + n - 1) // n) * n


def _default_bf16():
    # bf16 transcendentals / matmul inputs only pay off on v6e/v7x (v5e's
    # EUP/VPU have no bf16 path); default conservatively.
    try:
        kind = jax.devices()[0].device_kind.lower()
    except Exception:
        return False
    return ("v6" in kind) or ("v7" in kind)


def _antideriv_tanh(z, act_dtype):
    # act(z) = |z| + log1p(exp(-2|z|)).
    # abs/add stay f32 on the VPU; the two transcendentals (the EUP bottleneck)
    # run in act_dtype (bf16 on v6e/v7x ~2x EUP throughput, f32 elsewhere).
    az = jnp.abs(z)
    t = jnp.log1p(jnp.exp((-2.0 * az).astype(act_dtype)))
    return az + t.astype(jnp.float32)


def _resnn_kernel(x_ref, w0_ref, b0_ref, wh_ref, bh_ref, o_ref, *, nTh, h,
                  act_dtype, mm_dtype):
    x = x_ref[...]

    # Opening layer Linear(d, m): small-K dot on the otherwise-idle MXU.
    z = jnp.dot(x.astype(mm_dtype), w0_ref[...].astype(mm_dtype),
                preferred_element_type=jnp.float32)
    z = z + b0_ref[...].astype(jnp.float32)
    u = _antideriv_tanh(z, act_dtype)

    # Residual hidden layers: u = u + h * act(u @ Wi + bi).
    # nTh is static and small -> unrolled at trace time.
    # TODO(synk): for large m*nTh, add a grid axis over layers so wh[i] streams
    # instead of holding all (nTh-1, m_pad, m_pad) resident (v7x 64 MiB VMEM).
    for i in range(nTh - 1):
        z = jnp.dot(u.astype(mm_dtype), wh_ref[i].astype(mm_dtype),
                    preferred_element_type=jnp.float32)
        z = z + bh_ref[i].astype(jnp.float32)
        u = u + h * _antideriv_tanh(z, act_dtype)

    o_ref[...] = u.astype(o_ref.dtype)


def prepare_params(w0, b0, wh, bh, *, param_dtype=jnp.float32):
    """Pad the hidden dim to a lane-dense multiple of 128 ONCE at init time.

    w0: (d, m), b0: (1, m), wh: (nTh-1, m, m), bh: (nTh-1, 1, m); weights are
    stored as (in, out) so the kernel computes y = x @ W + b on the MXU.
    Padded W input-rows are exactly zero so padded u-lanes never leak into
    real output lanes (invariant the kernel relies on).
    """
    d, m = w0.shape
    m_pad = _round_up(m, 128)
    pad = m_pad - m
    if pad:
        w0 = jnp.pad(w0, ((0, 0), (0, pad)))
        b0 = jnp.pad(b0, ((0, 0), (0, pad)))
        wh = jnp.pad(wh, ((0, 0), (0, pad), (0, pad)))
        bh = jnp.pad(bh, ((0, 0), (0, 0), (0, pad)))
    return dict(
        w0=w0.astype(param_dtype), b0=b0.astype(param_dtype),
        wh=wh.astype(param_dtype), bh=bh.astype(param_dtype),
        d=d, m=m, m_pad=m_pad, nTh=wh.shape[0] + 1,
    )


def _resident_spec(shape):
    """Constant-index (VMEM-resident) spec; single-buffered when supported."""
    idx = lambda i: (0,) * len(shape)
    try:
        # Weights never change across grid steps; single-buffer them so the
        # resident footprint is 1x (matters most for v7x's 64 MiB VMEM).
        return pl.BlockSpec(shape, idx, pipeline_mode=pl.Buffered(1)), 1
    except TypeError:
        return pl.BlockSpec(shape, idx), 2


def resnn_forward(x, params, *, use_bf16=None, out_dtype=jnp.float32,
                  slice_output=True):
    """x: (nex, d) f32. params: output of prepare_params()."""
    nTh = params["nTh"]
    d, m, m_pad = params["d"], params["m"], params["m_pad"]
    assert nTh >= 2, "nTh must be >= 2 (matches the torch module's guard)"
    nex = x.shape[0]
    assert x.shape[1] == d
    h = 1.0 / (nTh - 1)

    if use_bf16 is None:
        use_bf16 = _default_bf16()
    act_dtype = jnp.bfloat16 if use_bf16 else jnp.float32
    mm_dtype = jnp.bfloat16 if use_bf16 else jnp.float32

    # --- Batch tiling ------------------------------------------------------
    # Large tiles amortize per-grid-step overhead; when a single tile would
    # cover the whole batch, split into >=2 so the "parallel" axis actually
    # uses both of v7x's TensorCores (harmless on single-TC v5e/v6e).
    cap = 4096
    n_tiles = max(1, pl.cdiv(nex, cap))
    if n_tiles == 1 and nex > 8:
        n_tiles = 2
    tile_nex = max(8, _round_up(pl.cdiv(nex, n_tiles), 8))
    nex_pad = _round_up(nex, tile_nex)
    if nex_pad != nex:
        x = jnp.pad(x, ((0, nex_pad - nex), (0, 0)))
    grid = (nex_pad // tile_nex,)

    # --- Specs (weights resident, batch streamed) ---------------------------
    w0_spec, w_bufs = _resident_spec((d, m_pad))
    b0_spec, _ = _resident_spec((1, m_pad))
    wh_spec, _ = _resident_spec((nTh - 1, m_pad, m_pad))
    bh_spec, _ = _resident_spec((nTh - 1, 1, m_pad))

    # --- VMEM limit from the actual footprint -------------------------------
    p_item = np.dtype(params["w0"].dtype).itemsize
    weight_elems = d * m_pad + m_pad + (nTh - 1) * (m_pad * m_pad + m_pad)
    weight_bytes = weight_elems * p_item * w_bufs
    io_bytes = 2 * tile_nex * (d * np.dtype(x.dtype).itemsize
                               + m_pad * np.dtype(out_dtype).itemsize)
    vmem_limit = max(32 << 20, int(1.25 * (weight_bytes + io_bytes)) + (2 << 20))

    kernel = functools.partial(_resnn_kernel, nTh=nTh, h=h,
                               act_dtype=act_dtype, mm_dtype=mm_dtype)

    out = pl.pallas_call(
        kernel,
        out_shape=jax.ShapeDtypeStruct((nex_pad, m_pad), out_dtype),
        grid=grid,
        in_specs=[
            # Batch-tiled input: streamed / double-buffered across the grid.
            pl.BlockSpec((tile_nex, d), lambda i: (i, 0)),
            w0_spec, b0_spec, wh_spec, bh_spec,
        ],
        out_specs=pl.BlockSpec((tile_nex, m_pad), lambda i: (i, 0)),
        compiler_params=pltpu.CompilerParams(
            dimension_semantics=("parallel",),
            vmem_limit_bytes=vmem_limit,
        ),
    )(x, params["w0"], params["b0"], params["wh"], params["bh"])

    if slice_output:
        return out[:nex, :m]
    # NOTE: padded lanes m..m_pad-1 of the un-sliced slab are NOT zero
    # (antiderivTanh(0)=log 2 accumulates h*log2 per residual layer);
    # downstream consumers must ignore them.
    return out


def _ref_forward(x, w0, b0, wh, bh, *, nTh):
    h = 1.0 / (nTh - 1)
    u = _antideriv_tanh(x @ w0 + b0, jnp.float32)
    for i in range(nTh - 1):
        u = u + h * _antideriv_tanh(u @ wh[i] + bh[i], jnp.float32)
    return u


if __name__ == "__main__":
    # Small, module-consistent shapes: d=4 input features ("d+1" space-time),
    # hidden m=32, nTh=3 residual layers, batch nex=8.
    d, m, nTh, nex = 4, 32, 3, 8

    key = jax.random.PRNGKey(0)
    kx, kw0, kb0, kw1, kb1 = jax.random.split(key, 5)

    x = jax.random.normal(kx, (nex, d), dtype=jnp.float32)

    # Deterministic parameter init (PyTorch Linear-style uniform bounds).
    bound0 = 1.0 / jnp.sqrt(d)
    w0 = jax.random.uniform(kw0, (d, m), minval=-bound0, maxval=bound0,
                            dtype=jnp.float32)
    b0 = jax.random.uniform(kb0, (1, m), minval=-bound0, maxval=bound0,
                            dtype=jnp.float32)

    # layers[2:] are deepcopies of layers[1] in the torch module, so every
    # hidden layer shares identical (but independently stored) parameters.
    bound1 = 1.0 / jnp.sqrt(m)
    w1 = jax.random.uniform(kw1, (m, m), minval=-bound1, maxval=bound1,
                            dtype=jnp.float32)
    b1 = jax.random.uniform(kb1, (1, m), minval=-bound1, maxval=bound1,
                            dtype=jnp.float32)
    wh = jnp.broadcast_to(w1, (nTh - 1, m, m)).copy()
    bh = jnp.broadcast_to(b1, (nTh - 1, 1, m)).copy()

    ref = _ref_forward(x, w0, b0, wh, bh, nTh=nTh)

    # f32 path: exact check against the torch-semantics reference.
    params_f32 = prepare_params(w0, b0, wh, bh, param_dtype=jnp.float32)
    out = jax.block_until_ready(resnn_forward(x, params_f32, use_bf16=False))
    assert out.shape == (nex, m)
    assert jnp.allclose(out, ref, atol=1e-5, rtol=1e-5)

    # bf16 EUP/MXU path (the main v6e/v7x compute lever); looser tolerance.
    params_bf16 = prepare_params(w0, b0, wh, bh, param_dtype=jnp.bfloat16)
    out_bf = jax.block_until_ready(resnn_forward(x, params_bf16, use_bf16=True))
    assert out_bf.shape == (nex, m)
    assert jnp.allclose(out_bf.astype(jnp.float32), ref, atol=1e-1, rtol=1e-1)

    print("KERNEL_OK")
</pallas_src>

<mosaic_0001>
module attributes {stable_mosaic.version = 11 : i64} {
  func.func @_resnn_kernel(%arg0: i32, %arg1: memref<8x4xf32, #tpu.memory_space<vmem>>, %arg2: memref<4x128xf32, #tpu.memory_space<vmem>>, %arg3: memref<1x128xf32, #tpu.memory_space<vmem>>, %arg4: memref<2x128x128xf32, #tpu.memory_space<vmem>>, %arg5: memref<2x1x128xf32, #tpu.memory_space<vmem>>, %arg6: memref<8x128xf32, #tpu.memory_space<vmem>>) attributes {dimension_semantics = [#tpu.dimension_semantics<parallel>], iteration_bounds = array<i64: 1>, scalar_prefetch = 0 : i64, scratch_operands = 0 : i64, tpu.core_type = #tpu.core_type<tc>, window_params = [{transform_indices = @transform_0, window_bounds = array<i64: 8, 4>}, {pipeline_mode = #tpu.pipeline_mode<synchronous>, transform_indices = @transform_1, window_bounds = array<i64: 4, 128>}, {pipeline_mode = #tpu.pipeline_mode<synchronous>, transform_indices = @transform_2, window_bounds = array<i64: 1, 128>}, {pipeline_mode = #tpu.pipeline_mode<synchronous>, transform_indices = @transform_3, window_bounds = array<i64: 2, 128, 128>}, {pipeline_mode = #tpu.pipeline_mode<synchronous>, transform_indices = @transform_4, window_bounds = array<i64: 2, 1, 128>}, {transform_indices = @transform_5, window_bounds = array<i64: 8, 128>}]} {
    %c0 = arith.constant 0 : index
    %c0_0 = arith.constant 0 : index
    %0 = vector.load %arg1[%c0, %c0_0] : memref<8x4xf32, #tpu.memory_space<vmem>>, vector<8x4xf32>
    %c0_1 = arith.constant 0 : index
    %c0_2 = arith.constant 0 : index
    %1 = vector.load %arg2[%c0_1, %c0_2] : memref<4x128xf32, #tpu.memory_space<vmem>>, vector<4x128xf32>
    %cst = arith.constant dense<0.000000e+00> : vector<8x128xf32>
    %2 = tpu.matmul %0, %1, %cst {dimension_numbers = #tpu.dot_dimension_numbers<[1], [0], [0], [1], [0, 0, 1, 1], [], []>} : vector<8x4xf32>, vector<4x128xf32>, vector<8x128xf32> -> vector<8x128xf32>
    %c0_3 = arith.constant 0 : index
    %c0_4 = arith.constant 0 : index
    %3 = vector.load %arg3[%c0_3, %c0_4] : memref<1x128xf32, #tpu.memory_space<vmem>>, vector<1x128xf32>
    %4 = vector.broadcast %3 : vector<1x128xf32> to vector<8x128xf32>
    %5 = arith.addf %2, %4 : vector<8x128xf32>
    %6 = math.absf %5 : vector<8x128xf32>
    %cst_5 = arith.constant -2.000000e+00 : f32
    %7 = vector.broadcast %cst_5 : f32 to vector<8x128xf32>
    %8 = arith.mulf %7, %6 : vector<8x128xf32>
    %9 = math.exp %8 : vector<8x128xf32>
    %10 = math.log1p %9 : vector<8x128xf32>
    %11 = arith.addf %6, %10 : vector<8x128xf32>
    %c0_6 = arith.constant 0 : index
    %c0_7 = arith.constant 0 : index
    %c0_8 = arith.constant 0 : index
    %12 = vector.load %arg4[%c0_6, %c0_7, %c0_8] : memref<2x128x128xf32, #tpu.memory_space<vmem>>, vector<1x128x128xf32>
    %13 = vector.shape_cast %12 : vector<1x128x128xf32> to vector<128x128xf32>
    %cst_9 = arith.constant dense<0.000000e+00> : vector<8x128xf32>
    %14 = tpu.matmul %11, %13, %cst_9 {dimension_numbers = #tpu.dot_dimension_numbers<[1], [0], [0], [1], [0, 0, 1, 1], [], []>} : vector<8x128xf32>, vector<128x128xf32>, vector<8x128xf32> -> vector<8x128xf32>
    %c0_10 = arith.constant 0 : index
    %c0_11 = arith.constant 0 : index
    %c0_12 = arith.constant 0 : index
    %15 = vector.load %arg5[%c0_10, %c0_11, %c0_12] : memref<2x1x128xf32, #tpu.memory_space<vmem>>, vector<1x1x128xf32>
    %16 = vector.shape_cast %15 : vector<1x1x128xf32> to vector<1x128xf32>
    %17 = vector.broadcast %16 : vector<1x128xf32> to vector<8x128xf32>
    %18 = arith.addf %14, %17 : vector<8x128xf32>
    %19 = math.absf %18 : vector<8x128xf32>
    %cst_13 = arith.constant -2.000000e+00 : f32
    %20 = vector.broadcast %cst_13 : f32 to vector<8x128xf32>
    %21 = arith.mulf %20, %19 : vector<8x128xf32>
    %22 = math.exp %21 : vector<8x128xf32>
    %23 = math.log1p %22 : vector<8x128xf32>
    %24 = arith.addf %19, %23 : vector<8x128xf32>
    %cst_14 = arith.constant 5.000000e-01 : f32
    %25 = vector.broadcast %cst_14 : f32 to vector<8x128xf32>
    %26 = arith.mulf %25, %24 : vector<8x128xf32>
    %27 = arith.addf %11, %26 : vector<8x128xf32>
    %c1 = arith.constant 1 : index
    %c0_15 = arith.constant 0 : index
    %c0_16 = arith.constant 0 : index
    %28 = vector.load %arg4[%c1, %c0_15, %c0_16] : memref<2x128x128xf32, #tpu.memory_space<vmem>>, vector<1x128x128xf32>
    %29 = vector.shape_cast %28 : vector<1x128x128xf32> to vector<128x128xf32>
    %cst_17 = arith.constant dense<0.000000e+00> : vector<8x128xf32>
    %30 = tpu.matmul %27, %29, %cst_17 {dimension_numbers = #tpu.dot_dimension_numbers<[1], [0], [0], [1], [0, 0, 1, 1], [], []>} : vector<8x128xf32>, vector<128x128xf32>, vector<8x128xf32> -> vector<8x128xf32>
    %c1_18 = arith.constant 1 : index
    %c0_19 = arith.constant 0 : index
    %c0_20 = arith.constant 0 : index
    %31 = vector.load %arg5[%c1_18, %c0_19, %c0_20] : memref<2x1x128xf32, #tpu.memory_space<vmem>>, vector<1x1x128xf32>
    %32 = vector.shape_cast %31 : vector<1x1x128xf32> to vector<1x128xf32>
    %33 = vector.broadcast %32 : vector<1x128xf32> to vector<8x128xf32>
    %34 = arith.addf %30, %33 : vector<8x128xf32>
    %35 = math.absf %34 : vector<8x128xf32>
    %cst_21 = arith.constant -2.000000e+00 : f32
    %36 = vector.broadcast %cst_21 : f32 to vector<8x128xf32>
    %37 = arith.mulf %36, %35 : vector<8x128xf32>
    %38 = math.exp %37 : vector<8x128xf32>
    %39 = math.log1p %38 : vector<8x128xf32>
    %40 = arith.addf %35, %39 : vector<8x128xf32>
    %cst_22 = arith.constant 5.000000e-01 : f32
    %41 = vector.broadcast %cst_22 : f32 to vector<8x128xf32>
    %42 = arith.mulf %41, %40 : vector<8x128xf32>
    %43 = arith.addf %27, %42 : vector<8x128xf32>
    %c0_23 = arith.constant 0 : index
    %c0_24 = arith.constant 0 : index
    %44 = vector.load %arg6[%c0_23, %c0_24] : memref<8x128xf32, #tpu.memory_space<vmem>>, vector<8x128xf32>
    tpu.vector_store %arg6[%c0_23, %c0_24], %43 {strides = array<i32>} : memref<8x128xf32, #tpu.memory_space<vmem>>, vector<8x128xf32>,
    return
  }
  func.func @transform_0(%arg0: i32) -> (i32, i32) {
    %c0_i32 = arith.constant 0 : i32
    %c0_i32_0 = arith.constant 0 : i32
    return %arg0, %c0_i32 : i32, i32
  }
  func.func @transform_1(%arg0: i32) -> (i32, i32) {
    %c0_i32 = arith.constant 0 : i32
    %c0_i32_0 = arith.constant 0 : i32
    %c0_i32_1 = arith.constant 0 : i32
    return %c0_i32, %c0_i32_0 : i32, i32
  }
  func.func @transform_2(%arg0: i32) -> (i32, i32) {
    %c0_i32 = arith.constant 0 : i32
    %c0_i32_0 = arith.constant 0 : i32
    %c0_i32_1 = arith.constant 0 : i32
    return %c0_i32, %c0_i32_0 : i32, i32
  }
  func.func @transform_3(%arg0: i32) -> (i32, i32, i32) {
    %c0_i32 = arith.constant 0 : i32
    %c0_i32_0 = arith.constant 0 : i32
    %c0_i32_1 = arith.constant 0 : i32
    %c0_i32_2 = arith.constant 0 : i32
    return %c0_i32, %c0_i32_0, %c0_i32_1 : i32, i32, i32
  }
  func.func @transform_4(%arg0: i32) -> (i32, i32, i32) {
    %c0_i32 = arith.constant 0 : i32
    %c0_i32_0 = arith.constant 0 : i32
    %c0_i32_1 = arith.constant 0 : i32
    %c0_i32_2 = arith.constant 0 : i32
    return %c0_i32, %c0_i32_0, %c0_i32_1 : i32, i32, i32
  }
  func.func @transform_5(%arg0: i32) -> (i32, i32) {
    %c0_i32 = arith.constant 0 : i32
    %c0_i32_0 = arith.constant 0 : i32
    return %arg0, %c0_i32 : i32, i32
  }
}

</mosaic_0001>

<llo_original>
// kernel: tpu_custom_call.1
$region0: #{tpu_custom_call.1}
  #allocation0 [shape = 'u32[]', space=smem, size = 0x4, offset = 0x4, fixed_abs, tag = 'smem constant byte address 0x4 - core index']
  #allocation1 [shape = 'u32[144,128]{1,0:T(1,128)}', space=vmem, size = 0x12000, scoped, tag = 'internal scratch']
  %s0 = inlined_call_operand.vmem [shape: f32[8,4], index: 0, kind: input, shape index: {}]
  %s1 = inlined_call_operand.vmem [shape: f32[4,128], index: 1, kind: input, shape index: {}]
  %s2 = inlined_call_operand.vmem [shape: f32[1,128], index: 2, kind: input, shape index: {}]
  %s3 = inlined_call_operand.hbm [shape: f32[2,128,128], index: 3, kind: input, shape index: {}]
  %s4 = inlined_call_operand.vmem [shape: f32[2,1,128], index: 4, kind: input, shape index: {}]
  %s5 = inlined_call_operand.hbm [shape: f32[8,128], index: 5, kind: output, shape index: {}]
  %s6 = sld [smem:[#allocation0]]
  $region34: #{tpu_custom_call.1} parent=0
    _
  %s8 = ssub.s32 1, %s6
  %s9 = scalar_select 0, %s8, %s6
  $region1: #{tpu_custom_call.1} parent=0
    #allocation2 [shape = 'u8[131072]{0}', space=vmem, size = 0x20000, scoped, tag = 'input window, operand 3, single buffered']
    #allocation3 [shape = 's32[1]{0}', space=sflag, size = 0x4, scoped, tag = 'scoped memory for tpu_custom_call.1']
    #allocation4 [shape = 's32[1]{0}', space=sflag, size = 0x4, scoped, tag = 'scoped memory for tpu_custom_call.1']
    #allocation5 [shape = 'u8[4096]{0}', space=vmem, size = 0x1000, scoped, tag = 'output window, operand 0, single buffered']
    %10 = vsyncpa [#allocation3], 0
    %11 = vsyncpa [#allocation4], 0
    // Predicated region
    $region2: #{tpu_custom_call.1} parent=1 // pred_check
      _
    $region3: #{tpu_custom_call.1} parent=1 // pred_check_branch
      %13 = sbr.rel (0) target = $region5
    $region4: #{tpu_custom_call.1} parent=1 // pred_region
      _
    $region5: #{tpu_custom_call.1} parent=1 // pred_fallthru
      _
    // Predicated region
    $region6: #{tpu_custom_call.1} parent=1 // pred_check
      _
    $region7: #{tpu_custom_call.1} parent=1 // pred_check_branch
      %15 = sbr.rel (0) target = $region9
    $region8: #{tpu_custom_call.1} parent=1 // pred_region
      _
    $region9: #{tpu_custom_call.1} parent=1 // pred_fallthru
      _
    // Predicated region
    $region10: #{tpu_custom_call.1} parent=1 // pred_check
      _
    $region11: #{tpu_custom_call.1} parent=1 // pred_check_branch
      %17 = sbr.rel (0) target = $region13
    $region12: #{tpu_custom_call.1} parent=1 // pred_region
      _
    $region13: #{tpu_custom_call.1} parent=1 // pred_fallthru
      _
    // Predicated region
    $region14: #{tpu_custom_call.1} parent=1 // pred_check
      _
    $region15: #{tpu_custom_call.1} parent=1 // pred_check_branch
      %19 = sbr.rel (0) target = $region17
    $region16: #{tpu_custom_call.1} parent=1 // pred_region
      %s21 = ssub.s32 4096, 4096
      %22 = vsyncadd [#allocation3], %s21
      %s23 = sshll.u32 [#allocation2], 4
      %s24 = int_to_ptr.vmem [resolvable:$true] %s23
      %29 = dma.hbm_to_vmem [thread:$0]  %s3, 4096, %s24, [#allocation3], 128, 128, 8
    $region17: #{tpu_custom_call.1} parent=1 // pred_fallthru
      _
    // Predicated region
    $region18: #{tpu_custom_call.1} parent=1 // pred_check
      _
    $region19: #{tpu_custom_call.1} parent=1 // pred_check_branch
      %31 = sbr.rel (0) target = $region21
    $region20: #{tpu_custom_call.1} parent=1 // pred_region
      _
    $region21: #{tpu_custom_call.1} parent=1 // pred_fallthru
      _
    // Predicated region
    $region22: #{tpu_custom_call.1} parent=1 // pred_check
      _
    $region23: #{tpu_custom_call.1} parent=1 // pred_check_branch
      %33 = sbr.rel (0) target = $region25
    $region24: #{tpu_custom_call.1} parent=1 // pred_region
      %34 = dma.done [#allocation3], 4096
    $region25: #{tpu_custom_call.1} parent=1 // pred_fallthru
      _
    %v35 = vld [vmem:[%s0] sm:$0xff]
    %v36 = vld [vmem:[%s1] sm:$0xf]
    %v37 = vld [vmem:[%s2] sm:$0x1]
    %v39 = vlaneseq
    %v40 = vshrl.u32 %v39, 7
    %v41 = vsub.s32 0, %v40
    %v42 = vrot.slane %v37, %v41
    %vm44 = vcmask 31744
    %v46 = vsel %vm44, %v35, 0
    %vm48 = vcmask 1043456
    %v50 = vsel %vm48, %v36, 0
    %52 = vmatprep.subr.mxu0 0.0
    %53 = vmatpush1.msra.mxu0 0.0
    %54 = vmatprep.subr.mxu0 0.0
    %55 = vmatpush1.msra.mxu0 0.0
    %56 = vmatprep.subr.mxu0 0.0
    %57 = vmatpush1.msra.mxu0 0.0
    %58 = vmatprep.subr.mxu0 0.0
    %59 = vmatpush1.msra.mxu0 0.0
    %60 = vmatprep.subr.mxu0 0.0
    %61 = vmatpush1.msra.mxu0 0.0
    %62 = vmatprep.subr.mxu0 0.0
    %63 = vmatpush1.msra.mxu0 0.0
    %64 = vmatprep.subr.mxu0 0.0
    %65 = vmatpush1.msra.mxu0 0.0
    %66 = vmatprep.subr.mxu0 0.0
    %67 = vmatpush1.msra.mxu0 0.0
    %68 = vmatprep.subr.mxu0 0.0
    %69 = vmatpush1.msra.mxu0 0.0
    %70 = vmatprep.subr.mxu0 0.0
    %71 = vmatpush1.msra.mxu0 0.0
    %72 = vmatprep.subr.mxu0 0.0
    %73 = vmatpush1.msra.mxu0 0.0
    %74 = vmatprep.subr.mxu0 0.0
    %75 = vmatpush1.msra.mxu0 0.0
    %76 = vmatprep.subr.mxu0 0.0
    %77 = vmatpush1.msra.mxu0 0.0
    %78 = vmatprep.subr.mxu0 0.0
    %79 = vmatpush1.msra.mxu0 0.0
    %80 = vmatprep.subr.mxu0 0.0
    %81 = vmatpush1.msra.mxu0 0.0
    %82 = vmatprep.subr.mxu0 0.0
    %83 = vmatpush1.msra.mxu0 %v50
    %84 = vmatprep.subr.mxu0 0.0
    %85 = vmatpush2.msra.mxu0 0.0
    %86 = vmatprep.subr.mxu0 0.0
    %87 = vmatpush2.msra.mxu0 0.0
    %88 = vmatprep.subr.mxu0 0.0
    %89 = vmatpush2.msra.mxu0 0.0
    %90 = vmatprep.subr.mxu0 0.0
    %91 = vmatpush2.msra.mxu0 0.0
    %92 = vmatprep.subr.mxu0 0.0
    %93 = vmatpush2.msra.mxu0 0.0
    %94 = vmatprep.subr.mxu0 0.0
    %95 = vmatpush2.msra.mxu0 0.0
    %96 = vmatprep.subr.mxu0 0.0
    %97 = vmatpush2.msra.mxu0 0.0
    %98 = vmatprep.subr.mxu0 0.0
    %99 = vmatpush2.msra.mxu0 0.0
    %100 = vmatprep.subr.mxu0 0.0
    %101 = vmatpush2.msra.mxu0 0.0
    %102 = vmatprep.subr.mxu0 0.0
    %103 = vmatpush2.msra.mxu0 0.0
    %104 = vmatprep.subr.mxu0 0.0
    %105 = vmatpush2.msra.mxu0 0.0
    %106 = vmatprep.subr.mxu0 0.0
    %107 = vmatpush2.msra.mxu0 0.0
    %108 = vmatprep.subr.mxu0 0.0
    %109 = vmatpush2.msra.mxu0 0.0
    %110 = vmatprep.subr.mxu0 0.0
    %111 = vmatpush2.msra.mxu0 0.0
    %112 = vmatprep.subr.mxu0 0.0
    %113 = vmatpush2.msra.mxu0 0.0
    %114 = vmatprep.subr.mxu0 0.0
    %115 = vmatpush2.msra.mxu0 0.0
    %116 = vmatprep.mubr.f32.mxu0 0.0
    %117 = vmatmul.mubr.f32.gmra.mxu0 %v46
    %v118 = vpop.f32.mrf.mxu0
    %v119 = vadd.f32 %v42, %v118
    %v120 = vpop.f32.mrf.mxu0
    %121 = vdwg.mxu0
    %v122 = vand.u32 2147483647, %v119
    %v123 = vmul.f32 %v122, -2.0
    %v124 = vmul.f32 %v123, 1.442695
    %v125 = vpow.pop %v124
    %v126 = vadd.f32 %v125, 1.0
    %v127 = vlog2.pop %v126
    %v128 = vmul.f32 %v127, 0.6931472
    %v129 = vmul.f32 -0.5, %v125
    %v130 = vadd.f32 %v129, 1.0
    %v131 = vmul.f32 %v130, %v125
    %v132 = vand.u32 2147483647, %v125
    %vm133 = vcmp.lt.f32.partialorder %v132, 0.0004427343
    %v134 = vsel %vm133, %v131, %v128
    %v135 = vadd.f32 %v122, %v134
    %v136 = vld [vmem:[#allocation2] sm:$0xff]
    %v137 = vld [vmem:[#allocation2 + $0x8] sm:$0xff]
    %v138 = vld [vmem:[#allocation2 + $0x10] sm:$0xff]
    %v139 = vld [vmem:[#allocation2 + $0x18] sm:$0xff]
    %v140 = vld [vmem:[#allocation2 + $0x20] sm:$0xff]
    %v141 = vld [vmem:[#allocation2 + $0x28] sm:$0xff]
    %v142 = vld [vmem:[#allocation2 + $0x30] sm:$0xff]
    %v143 = vld [vmem:[#allocation2 + $0x38] sm:$0xff]
    %v144 = vld [vmem:[#allocation2 + $0x40] sm:$0xff]
    %v145 = vld [vmem:[#allocation2 + $0x48] sm:$0xff]
    %v146 = vld [vmem:[#allocation2 + $0x50] sm:$0xff]
    %v147 = vld [vmem:[#allocation2 + $0x58] sm:$0xff]
    %v148 = vld [vmem:[#allocation2 + $0x60] sm:$0xff]
    %v149 = vld [vmem:[#allocation2 + $0x68] sm:$0xff]
    %v150 = vld [vmem:[#allocation2 + $0x70] sm:$0xff]
    %v151 = vld [vmem:[#allocation2 + $0x78] sm:$0xff]
    %v152 = vld [vmem:[%s4] sm:$0x1]
    %v154 = vlaneseq
    %v155 = vshrl.u32 %v154, 7
    %v156 = vsub.s32 0, %v155
    %v157 = vrot.slane %v152, %v156
    %159 = vmatprep.subr.mxu0 0.0
    %160 = vmatpush1.msra.mxu0 %v151
    %161 = vmatprep.subr.mxu0 0.0
    %162 = vmatpush1.msra.mxu0 %v150
    %163 = vmatprep.subr.mxu0 0.0
    %164 = vmatpush1.msra.mxu0 %v149
    %165 = vmatprep.subr.mxu0 0.0
    %166 = vmatpush1.msra.mxu0 %v148
    %167 = vmatprep.subr.mxu0 0.0
    %168 = vmatpush1.msra.mxu0 %v147
    %169 = vmatprep.subr.mxu0 0.0
    %170 = vmatpush1.msra.mxu0 %v146
    %171 = vmatprep.subr.mxu0 0.0
    %172 = vmatpush1.msra.mxu0 %v145
    %173 = vmatprep.subr.mxu0 0.0
    %174 = vmatpush1.msra.mxu0 %v144
    %175 = vmatprep.subr.mxu0 0.0
    %176 = vmatpush1.msra.mxu0 %v143
    %177 = vmatprep.subr.mxu0 0.0
    %178 = vmatpush1.msra.mxu0 %v142
    %179 = vmatprep.subr.mxu0 0.0
    %180 = vmatpush1.msra.mxu0 %v141
    %181 = vmatprep.subr.mxu0 0.0
    %182 = vmatpush1.msra.mxu0 %v140
    %183 = vmatprep.subr.mxu0 0.0
    %184 = vmatpush1.msra.mxu0 %v139
    %185 = vmatprep.subr.mxu0 0.0
    %186 = vmatpush1.msra.mxu0 %v138
    %187 = vmatprep.subr.mxu0 0.0
    %188 = vmatpush1.msra.mxu0 %v137
    %189 = vmatprep.subr.mxu0 0.0
    %190 = vmatpush1.msra.mxu0 %v136
    %191 = vmatprep.subr.mxu0 0.0
    %192 = vmatpush2.msra.mxu0 0.0
    %193 = vmatprep.subr.mxu0 0.0
    %194 = vmatpush2.msra.mxu0 0.0
    %195 = vmatprep.subr.mxu0 0.0
    %196 = vmatpush2.msra.mxu0 0.0
    %197 = vmatprep.subr.mxu0 0.0
    %198 = vmatpush2.msra.mxu0 0.0
    %199 = vmatprep.subr.mxu0 0.0
    %200 = vmatpush2.msra.mxu0 0.0
    %201 = vmatprep.subr.mxu0 0.0
    %202 = vmatpush2.msra.mxu0 0.0
    %203 = vmatprep.subr.mxu0 0.0
    %204 = vmatpush2.msra.mxu0 0.0
    %205 = vmatprep.subr.mxu0 0.0
    %206 = vmatpush2.msra.mxu0 0.0
    %207 = vmatprep.subr.mxu0 0.0
    %208 = vmatpush2.msra.mxu0 0.0
    %209 = vmatprep.subr.mxu0 0.0
    %210 = vmatpush2.msra.mxu0 0.0
    %211 = vmatprep.subr.mxu0 0.0
    %212 = vmatpush2.msra.mxu0 0.0
    %213 = vmatprep.subr.mxu0 0.0
    %214 = vmatpush2.msra.mxu0 0.0
    %215 = vmatprep.subr.mxu0 0.0
    %216 = vmatpush2.msra.mxu0 0.0
    %217 = vmatprep.subr.mxu0 0.0
    %218 = vmatpush2.msra.mxu0 0.0
    %219 = vmatprep.subr.mxu0 0.0
    %220 = vmatpush2.msra.mxu0 0.0
    %221 = vmatprep.subr.mxu0 0.0
    %222 = vmatpush2.msra.mxu0 0.0
    %223 = vmatprep.mubr.f32.mxu0 0.0
    %224 = vmatmul.mubr.f32.gmra.mxu0 %v135
    %v225 = vpop.f32.mrf.mxu0
    %v226 = vadd.f32 %v157, %v225
    %v227 = vpop.f32.mrf.mxu0
    %228 = vdwg.mxu0
    %v229 = vand.u32 2147483647, %v226
    %v230 = vmul.f32 %v229, -2.0
    %v231 = vmul.f32 %v230, 1.442695
    %v232 = vpow.pop %v231
    %v233 = vadd.f32 %v232, 1.0
    %v234 = vlog2.pop %v233
    %v235 = vmul.f32 %v234, 0.6931472
    %v236 = vmul.f32 -0.5, %v232
    %v237 = vadd.f32 %v236, 1.0
    %v238 = vmul.f32 %v237, %v232
    %v239 = vand.u32 2147483647, %v232
    %vm240 = vcmp.lt.f32.partialorder %v239, 0.0004427343
    %v241 = vsel %vm240, %v238, %v235
    %v242 = vadd.f32 %v229, %v241
    %v243 = vmul.f32 %v242, 0.5
    %v244 = vadd.f32 %v135, %v243
    %s245 = scalar_lea.vmem [#allocation2], 128
    %v246 = vld [vmem:[%s245] sm:$0xff]
    %v247 = vld [vmem:[%s245 + $0x8] sm:$0xff]
    %v248 = vld [vmem:[%s245 + $0x10] sm:$0xff]
    %v249 = vld [vmem:[%s245 + $0x18] sm:$0xff]
    %v250 = vld [vmem:[%s245 + $0x20] sm:$0xff]
    %v251 = vld [vmem:[%s245 + $0x28] sm:$0xff]
    %v252 = vld [vmem:[%s245 + $0x30] sm:$0xff]
    %v253 = vld [vmem:[%s245 + $0x38] sm:$0xff]
    %v254 = vld [vmem:[%s245 + $0x40] sm:$0xff]
    %v255 = vld [vmem:[%s245 + $0x48] sm:$0xff]
    %v256 = vld [vmem:[%s245 + $0x50] sm:$0xff]
    %v257 = vld [vmem:[%s245 + $0x58] sm:$0xff]
    %v258 = vld [vmem:[%s245 + $0x60] sm:$0xff]
    %v259 = vld [vmem:[%s245 + $0x68] sm:$0xff]
    %v260 = vld [vmem:[%s245 + $0x70] sm:$0xff]
    %v261 = vld [vmem:[%s245 + $0x78] sm:$0xff]
    %s262 = scalar_lea.vmem %s4, 1
    %v263 = vld [vmem:[%s262] sm:$0x1]
    %v265 = vlaneseq
    %v266 = vshrl.u32 %v265, 7
    %v267 = vsub.s32 0, %v266
    %v268 = vrot.slane %v263, %v267
    %270 = vmatprep.subr.mxu0 0.0
    %271 = vmatpush1.msra.mxu0 %v261
    %272 = vmatprep.subr.mxu0 0.0
    %273 = vmatpush1.msra.mxu0 %v260
    %274 = vmatprep.subr.mxu0 0.0
    %275 = vmatpush1.msra.mxu0 %v259
    %276 = vmatprep.subr.mxu0 0.0
    %277 = vmatpush1.msra.mxu0 %v258
    %278 = vmatprep.subr.mxu0 0.0
    %279 = vmatpush1.msra.mxu0 %v257
    %280 = vmatprep.subr.mxu0 0.0
    %281 = vmatpush1.msra.mxu0 %v256
    %282 = vmatprep.subr.mxu0 0.0
    %283 = vmatpush1.msra.mxu0 %v255
    %284 = vmatprep.subr.mxu0 0.0
    %285 = vmatpush1.msra.mxu0 %v254
    %286 = vmatprep.subr.mxu0 0.0
    %287 = vmatpush1.msra.mxu0 %v253
    %288 = vmatprep.subr.mxu0 0.0
    %289 = vmatpush1.msra.mxu0 %v252
    %290 = vmatprep.subr.mxu0 0.0
    %291 = vmatpush1.msra.mxu0 %v251
    %292 = vmatprep.subr.mxu0 0.0
    %293 = vmatpush1.msra.mxu0 %v250
    %294 = vmatprep.subr.mxu0 0.0
    %295 = vmatpush1.msra.mxu0 %v249
    %296 = vmatprep.subr.mxu0 0.0
    %297 = vmatpush1.msra.mxu0 %v248
    %298 = vmatprep.subr.mxu0 0.0
    %299 = vmatpush1.msra.mxu0 %v247
    %300 = vmatprep.subr.mxu0 0.0
    %301 = vmatpush1.msra.mxu0 %v246
    %302 = vmatprep.subr.mxu0 0.0
    %303 = vmatpush2.msra.mxu0 0.0
    %304 = vmatprep.subr.mxu0 0.0
    %305 = vmatpush2.msra.mxu0 0.0
    %306 = vmatprep.subr.mxu0 0.0
    %307 = vmatpush2.msra.mxu0 0.0
    %308 = vmatprep.subr.mxu0 0.0
    %309 = vmatpush2.msra.mxu0 0.0
    %310 = vmatprep.subr.mxu0 0.0
    %311 = vmatpush2.msra.mxu0 0.0
    %312 = vmatprep.subr.mxu0 0.0
    %313 = vmatpush2.msra.mxu0 0.0
    %314 = vmatprep.subr.mxu0 0.0
    %315 = vmatpush2.msra.mxu0 0.0
    %316 = vmatprep.subr.mxu0 0.0
    %317 = vmatpush2.msra.mxu0 0.0
    %318 = vmatprep.subr.mxu0 0.0
    %319 = vmatpush2.msra.mxu0 0.0
    %320 = vmatprep.subr.mxu0 0.0
    %321 = vmatpush2.msra.mxu0 0.0
    %322 = vmatprep.subr.mxu0 0.0
    %323 = vmatpush2.msra.mxu0 0.0
    %324 = vmatprep.subr.mxu0 0.0
    %325 = vmatpush2.msra.mxu0 0.0
    %326 = vmatprep.subr.mxu0 0.0
    %327 = vmatpush2.msra.mxu0 0.0
    %328 = vmatprep.subr.mxu0 0.0
    %329 = vmatpush2.msra.mxu0 0.0
    %330 = vmatprep.subr.mxu0 0.0
    %331 = vmatpush2.msra.mxu0 0.0
    %332 = vmatprep.subr.mxu0 0.0
    %333 = vmatpush2.msra.mxu0 0.0
    %334 = vmatprep.mubr.f32.mxu0 0.0
    %335 = vmatmul.mubr.f32.gmra.mxu0 %v244
    %v336 = vpop.f32.mrf.mxu0
    %v337 = vadd.f32 %v268, %v336
    %v338 = vpop.f32.mrf.mxu0
    %339 = vdwg.mxu0
    %v340 = vand.u32 2147483647, %v337
    %v341 = vmul.f32 %v340, -2.0
    %v342 = vmul.f32 %v341, 1.442695
    %v343 = vpow.pop %v342
    %v344 = vadd.f32 %v343, 1.0
    %v345 = vlog2.pop %v344
    %v346 = vmul.f32 %v345, 0.6931472
    %v347 = vmul.f32 -0.5, %v343
    %v348 = vadd.f32 %v347, 1.0
    %v349 = vmul.f32 %v348, %v343
    %v350 = vand.u32 2147483647, %v343
    %vm351 = vcmp.lt.f32.partialorder %v350, 0.0004427343
    %v352 = vsel %vm351, %v349, %v346
    %v353 = vadd.f32 %v340, %v352
    %v354 = vmul.f32 %v353, 0.5
    %v355 = vadd.f32 %v244, %v354
    %356 = vst [vmem:[#allocation5] sm:$0xff] %v355
    // Predicated region
    $region26: #{tpu_custom_call.1} parent=1 // pred_check
      _
    $region27: #{tpu_custom_call.1} parent=1 // pred_check_branch
      %358 = sbr.rel (0) target = $region29
    $region28: #{tpu_custom_call.1} parent=1 // pred_region
      %s360 = ssub.s32 128, 128
      %361 = vsyncadd [#allocation4], %s360
      %s363 = sshll.u32 [#allocation5], 4
      %s364 = int_to_ptr.vmem [resolvable:$true] %s363
      %366 = dma.vmem_to_hbm [thread:$0]  %s364, 128, %s5, [#allocation4]
    $region29: #{tpu_custom_call.1} parent=1 // pred_fallthru
      _
    // Predicated region
    $region30: #{tpu_custom_call.1} parent=1 // pred_check
      _
    $region31: #{tpu_custom_call.1} parent=1 // pred_check_branch
      %368 = sbr.rel (0) target = $region33
    $region32: #{tpu_custom_call.1} parent=1 // pred_region
      %369 = dma.done [#allocation4], 128
    $region33: #{tpu_custom_call.1} parent=1 // pred_fallthru
      _
    %370 = vsyncpa [#allocation3], 1
    %371 = vsyncpa [#allocation4], 1

</llo_original>
